<compile_context>
chip_gen: v6e
topology: v6e:2x2x1
jax: 0.10.0
libtpu: 0.0.40
codegen_flags: <defaults>
</compile_context>

<pallas_src>
import functools

import jax
import jax.numpy as jnp
from jax.experimental import pallas as pl
from jax.experimental.pallas import tpu as pltpu


def _round_up(x, m):
    return ((x + m - 1) // m) * m


# --------------------------------------------------------------------------
# Kernel: fused (mu | value) 3-layer MLP over one row block.
# --------------------------------------------------------------------------
def _mujoco_ff_fused_kernel(
    obs_ref,            # [block_n, D]      (io dtype, bf16 by default)
    w1_ref, b1_ref,     # [D, 2H] (w dtype), [1, 2H] f32
    w2_ref, b2_ref,     # [2H, 2H] block-diag (w dtype), [1, 2H] f32
    w3_ref, b3_ref,     # [2H, OUT_W] (w dtype), [1, OUT_W] f32 (OUT_W >= A+1)
    out_ref,            # [block_n, OUT_W]  cols 0..A-1 = mu, col A = value
    *,
    action_size,
):
    # MXU dots run in the weights' dtype (bf16 by default) with f32
    # accumulation; bias adds and tanh stay f32 (v5e VPU/EUP are f32-only).
    x = obs_ref[...].astype(w1_ref.dtype)
    h = jnp.tanh(
        jnp.dot(x, w1_ref[...], preferred_element_type=jnp.float32) + b1_ref[...]
    )
    h = jnp.tanh(
        jnp.dot(h.astype(w2_ref.dtype), w2_ref[...],
                preferred_element_type=jnp.float32) + b2_ref[...]
    )
    z = jnp.dot(h.astype(w3_ref.dtype), w3_ref[...],
                preferred_element_type=jnp.float32) + b3_ref[...]

    # Static lane slices: mu columns get tanh, value (+ zero padding) columns
    # are linear.  action_size is a Python constant.
    out_ref[:, :action_size] = jnp.tanh(z[:, :action_size]).astype(out_ref.dtype)
    out_ref[:, action_size:] = z[:, action_size:].astype(out_ref.dtype)


# --------------------------------------------------------------------------
# pallas_call wrapper (row grid, VMEM-resident packed weights).
# --------------------------------------------------------------------------
def mujoco_ff_pallas(obs_pad, packed, action_size, block_n):
    """obs_pad: [N_pad, D] (N_pad % block_n == 0). Returns [N_pad, OUT_W]."""
    n_pad, d = obs_pad.shape
    w1, b1 = packed["w1"], packed["b1"]
    w2, b2 = packed["w2"], packed["b2"]
    w3, b3 = packed["w3"], packed["b3"]
    out_w = w3.shape[1]
    h1 = w1.shape[1]
    h2 = w2.shape[1]
    io_bytes = obs_pad.dtype.itemsize

    grid = (n_pad // block_n,)
    const_map = lambda i: (0, 0)          # weights/biases: same block every step

    in_specs = [
        pl.BlockSpec((block_n, d), lambda i: (i, 0)),   # obs rows (pipelined)
        pl.BlockSpec(w1.shape, const_map),
        pl.BlockSpec(b1.shape, const_map),
        pl.BlockSpec(w2.shape, const_map),
        pl.BlockSpec(b2.shape, const_map),
        pl.BlockSpec(w3.shape, const_map),
        pl.BlockSpec(b3.shape, const_map),
    ]
    out_specs = pl.BlockSpec((block_n, out_w), lambda i: (i, 0))

    # Advisory cost estimate for XLA's scheduler.
    flops = 2 * n_pad * (d * h1 + h1 * h2 + h2 * out_w)
    transcendentals = n_pad * (h1 + h2 + action_size)       # tanh count
    param_bytes = sum(
        int(p.size) * p.dtype.itemsize for p in (w1, b1, w2, b2, w3, b3)
    )
    bytes_accessed = io_bytes * n_pad * (d + out_w) + param_bytes

    return pl.pallas_call(
        functools.partial(_mujoco_ff_fused_kernel, action_size=action_size),
        out_shape=jax.ShapeDtypeStruct((n_pad, out_w), obs_pad.dtype),
        grid=grid,
        in_specs=in_specs,
        out_specs=out_specs,
        compiler_params=pltpu.CompilerParams(
            dimension_semantics=("parallel",),      # shard row axis on v7x megacore
            vmem_limit_bytes=32 * 1024 * 1024,      # safe on v5e/v6e and v7x (64 MiB/TC)
        ),
        cost_estimate=pl.CostEstimate(
            flops=int(flops),
            transcendentals=int(transcendentals),
            bytes_accessed=int(bytes_accessed),
        ),
    )(obs_pad, w1, b1, w2, b2, w3, b3)


# --------------------------------------------------------------------------
# Parameter construction / packing.
# --------------------------------------------------------------------------
def init_params(key, input_size, hidden_sizes, action_size, init_log_std=0.0):
    """Deterministic synthetic parameters (shapes match MujocoFfModel)."""
    h1, h2 = hidden_sizes
    keys = jax.random.split(key, 6)

    def lin(k, fan_in, fan_out):
        # torch.nn.Linear default init: U(-1/sqrt(fan_in), 1/sqrt(fan_in)),
        # stored here as [in, out].
        bound = 1.0 / jnp.sqrt(jnp.float32(fan_in))
        kw, kb = jax.random.split(k)
        w = jax.random.uniform(kw, (fan_in, fan_out), jnp.float32, -bound, bound)
        b = jax.random.uniform(kb, (1, fan_out), jnp.float32, -bound, bound)
        return w, b

    w1m, b1m = lin(keys[0], input_size, h1)
    w2m, b2m = lin(keys[1], h1, h2)
    w3m, b3m = lin(keys[2], h2, action_size)
    w1v, b1v = lin(keys[3], input_size, h1)
    w2v, b2v = lin(keys[4], h1, h2)
    w3v, b3v = lin(keys[5], h2, 1)
    log_std = jnp.full((1, action_size), init_log_std, dtype=jnp.float32)
    return dict(
        w1m=w1m, b1m=b1m, w2m=w2m, b2m=b2m, w3m=w3m, b3m=b3m,
        w1v=w1v, b1v=b1v, w2v=w2v, b2v=b2v, w3v=w3v, b3v=b3v,
        log_std=log_std,
    )


def pack_params(params, weight_dtype=jnp.bfloat16):
    """Pack mu-MLP and value-MLP into one fused wide network.

    Weights are stored in `weight_dtype` (bf16 by default -> native MXU rate);
    biases stay f32 so the VPU/EUP path (bias add + tanh) is f32 on all chips.
    Use weight_dtype=jnp.float32 if strict parity with a torch f32 reference
    is required.
    """
    w1m, w1v = params["w1m"], params["w1v"]
    w2m, w2v = params["w2m"], params["w2v"]
    w3m, w3v = params["w3m"], params["w3v"]
    h1m, h1v = w1m.shape[1], w1v.shape[1]
    h2m, h2v = w2m.shape[1], w2v.shape[1]
    action_size = w3m.shape[1]

    # Narrow output slab: just enough lanes for mu | value, rounded to 8.
    out_w = _round_up(action_size + 1, 8)

    w1 = jnp.concatenate([w1m, w1v], axis=1).astype(weight_dtype)       # [D, 2H]
    b1 = jnp.concatenate([params["b1m"], params["b1v"]], axis=1)        # [1, 2H] f32

    w2 = jnp.zeros((h1m + h1v, h2m + h2v), jnp.float32)
    w2 = w2.at[:h1m, :h2m].set(w2m).at[h1m:, h2m:].set(w2v)             # block-diag
    w2 = w2.astype(weight_dtype)
    b2 = jnp.concatenate([params["b2m"], params["b2v"]], axis=1)        # f32

    w3 = jnp.zeros((h2m + h2v, out_w), jnp.float32)
    w3 = w3.at[:h2m, :action_size].set(w3m)
    w3 = w3.at[h2m:, action_size:action_size + 1].set(w3v)
    w3 = w3.astype(weight_dtype)
    b3 = jnp.zeros((1, out_w), jnp.float32)
    b3 = b3.at[:, :action_size].set(params["b3m"])
    b3 = b3.at[:, action_size:action_size + 1].set(params["b3v"])

    return dict(w1=w1, b1=b1, w2=w2, b2=b2, w3=w3, b3=b3)


# --------------------------------------------------------------------------
# Forward wrapper (replicates MujocoFfModel.forward, normalize_observation=False).
# --------------------------------------------------------------------------
def mujoco_ff_forward(observation, prev_action, prev_reward, packed, log_std,
                      action_size, obs_ndim=1, max_block_n=8192,
                      io_dtype=jnp.bfloat16):
    """observation: [...lead, obs_dim]; lead dims of rank 0, 1 ([B]) or 2 ([T,B])."""
    del prev_action, prev_reward  # accepted and ignored, as in the reference
    # TODO(synk): normalize_observation / RunningMeanStdModel path not implemented
    # (disabled by default in the reference module).
    obs_shape = observation.shape
    lead_shape = obs_shape[: len(obs_shape) - obs_ndim]
    n = 1
    for s in lead_shape:
        n *= s
    n = max(n, 1)

    obs_flat = observation.reshape(n, -1).astype(io_dtype)

    # Row block: multiple of 16 (bf16 sublane packing), capped at max_block_n,
    # and <= ceil(N/2) so the grid has >= 2 steps whenever N allows it (lets the
    # "parallel" row axis shard across v7x's two TensorCores).
    max_block_n = max(16, (max_block_n // 16) * 16)
    half_rows = _round_up(-(-n // 2), 16)
    block_n = max(16, min(max_block_n, half_rows))
    n_pad = _round_up(n, block_n)
    if n_pad != n:
        # Only copies when the block does not divide N; padded rows are sliced
        # off below.
        obs_flat = jnp.pad(obs_flat, ((0, n_pad - n), (0, 0)))

    out = mujoco_ff_pallas(obs_flat, packed, action_size, block_n)

    mu = out[:n, :action_size].astype(jnp.float32).reshape(
        lead_shape + (action_size,))
    v = out[:n, action_size].astype(jnp.float32).reshape(lead_shape)
    # log_std: constant row, broadcast lazily in the wrapper (not in-kernel).
    log_std_out = jnp.broadcast_to(
        log_std.reshape(1, action_size), (n, action_size)
    ).reshape(lead_shape + (action_size,))
    return mu, log_std_out, v


# --------------------------------------------------------------------------
# Pure-JAX f32 reference (mirrors the PyTorch math) for a sanity check.
# --------------------------------------------------------------------------
def _reference_forward(observation, params, obs_ndim=1):
    obs_shape = observation.shape
    lead_shape = obs_shape[: len(obs_shape) - obs_ndim]
    x = observation.reshape(-1, obs_shape[-1]).astype(jnp.float32)
    h = jnp.tanh(x @ params["w1m"] + params["b1m"])
    h = jnp.tanh(h @ params["w2m"] + params["b2m"])
    mu = jnp.tanh(h @ params["w3m"] + params["b3m"])
    hv = jnp.tanh(x @ params["w1v"] + params["b1v"])
    hv = jnp.tanh(hv @ params["w2v"] + params["b2v"])
    v = hv @ params["w3v"] + params["b3v"]
    log_std = jnp.broadcast_to(params["log_std"], mu.shape)
    a = mu.shape[-1]
    return (mu.reshape(lead_shape + (a,)),
            log_std.reshape(lead_shape + (a,)),
            v.reshape(lead_shape))


if __name__ == "__main__":
    # Small shapes consistent with the module: vector obs, [T, B] leading dims.
    T, B = 2, 4
    OBS_DIM = 16
    HIDDEN = (64, 64)
    ACTION_SIZE = 8

    key = jax.random.PRNGKey(0)
    k_obs, k_act, k_rew, k_params, k_obs2 = jax.random.split(key, 5)

    observation = jax.random.normal(k_obs, (T, B, OBS_DIM), dtype=jnp.float32)
    prev_action = jax.random.normal(k_act, (T, B, ACTION_SIZE), dtype=jnp.float32)
    prev_reward = jax.random.normal(k_rew, (T, B), dtype=jnp.float32)

    params = init_params(k_params, OBS_DIM, HIDDEN, ACTION_SIZE, init_log_std=0.0)
    packed = pack_params(params)                      # bf16 weights (default)

    fwd = jax.jit(functools.partial(
        mujoco_ff_forward, packed=packed, log_std=params["log_std"],
        action_size=ACTION_SIZE))
    mu, log_std, v = fwd(observation, prev_action, prev_reward)
    jax.block_until_ready((mu, log_std, v))

    # Shape checks (same leading dims as input, as in restore_leading_dims).
    assert mu.shape == (T, B, ACTION_SIZE), mu.shape
    assert log_std.shape == (T, B, ACTION_SIZE), log_std.shape
    assert v.shape == (T, B), v.shape

    # Numerical check against the pure-f32 reference.  bf16 MXU operands +
    # bf16 I/O streaming introduce up to ~1e-2 deviation at these magnitudes.
    mu_r, log_std_r, v_r = _reference_forward(observation, params)
    TOL = 3e-2
    assert jnp.allclose(mu, mu_r, atol=TOL, rtol=TOL), \
        float(jnp.max(jnp.abs(mu - mu_r)))
    assert jnp.allclose(v, v_r, atol=TOL, rtol=TOL), \
        float(jnp.max(jnp.abs(v - v_r)))
    assert jnp.allclose(log_std, log_std_r, atol=1e-6, rtol=1e-6)

    # Exercise the multi-block + row-padding + multi-step-grid path:
    # N = 650 rows, block = 256 (grid of 3, last tile padded).
    T2, B2 = 5, 130
    obs2 = jax.random.normal(k_obs2, (T2, B2, OBS_DIM), dtype=jnp.float32)
    fwd2 = jax.jit(functools.partial(
        mujoco_ff_forward, packed=packed, log_std=params["log_std"],
        action_size=ACTION_SIZE, max_block_n=256))
    mu2, ls2, v2 = fwd2(obs2, None, None)
    jax.block_until_ready((mu2, ls2, v2))
    mu2_r, ls2_r, v2_r = _reference_forward(obs2, params)
    assert mu2.shape == (T2, B2, ACTION_SIZE)
    assert v2.shape == (T2, B2)
    assert jnp.allclose(mu2, mu2_r, atol=TOL, rtol=TOL), \
        float(jnp.max(jnp.abs(mu2 - mu2_r)))
    assert jnp.allclose(v2, v2_r, atol=TOL, rtol=TOL), \
        float(jnp.max(jnp.abs(v2 - v2_r)))
    assert jnp.allclose(ls2, ls2_r, atol=1e-6, rtol=1e-6)

    # Parity-gated f32 path (weights and I/O in f32) tracks the f32 reference
    # much more tightly.
    packed_f32 = pack_params(params, weight_dtype=jnp.float32)
    fwd3 = jax.jit(functools.partial(
        mujoco_ff_forward, packed=packed_f32, log_std=params["log_std"],
        action_size=ACTION_SIZE, io_dtype=jnp.float32))
    mu3, _, v3 = fwd3(observation, None, None)
    jax.block_until_ready((mu3, v3))
    assert jnp.allclose(mu3, mu_r, atol=1e-3, rtol=1e-3), \
        float(jnp.max(jnp.abs(mu3 - mu_r)))
    assert jnp.allclose(v3, v_r, atol=1e-3, rtol=1e-3), \
        float(jnp.max(jnp.abs(v3 - v_r)))

    print("KERNEL_OK")
</pallas_src>

<mosaic_0001>
module attributes {stable_mosaic.version = 11 : i64} {
  func.func @_mujoco_ff_fused_kernel(%arg0: i32, %arg1: memref<16x16xbf16, #tpu.memory_space<vmem>>, %arg2: memref<16x128xbf16, #tpu.memory_space<vmem>>, %arg3: memref<1x128xf32, #tpu.memory_space<vmem>>, %arg4: memref<128x128xbf16, #tpu.memory_space<vmem>>, %arg5: memref<1x128xf32, #tpu.memory_space<vmem>>, %arg6: memref<128x16xbf16, #tpu.memory_space<vmem>>, %arg7: memref<1x16xf32, #tpu.memory_space<vmem>>, %arg8: memref<16x16xbf16, #tpu.memory_space<vmem>>) attributes {dimension_semantics = [#tpu.dimension_semantics<parallel>], iteration_bounds = array<i64: 1>, scalar_prefetch = 0 : i64, scratch_operands = 0 : i64, tpu.core_type = #tpu.core_type<tc>, window_params = [{transform_indices = @transform_0, window_bounds = array<i64: 16, 16>}, {pipeline_mode = #tpu.pipeline_mode<synchronous>, transform_indices = @transform_1, window_bounds = array<i64: 16, 128>}, {pipeline_mode = #tpu.pipeline_mode<synchronous>, transform_indices = @transform_2, window_bounds = array<i64: 1, 128>}, {pipeline_mode = #tpu.pipeline_mode<synchronous>, transform_indices = @transform_3, window_bounds = array<i64: 128, 128>}, {pipeline_mode = #tpu.pipeline_mode<synchronous>, transform_indices = @transform_4, window_bounds = array<i64: 1, 128>}, {pipeline_mode = #tpu.pipeline_mode<synchronous>, transform_indices = @transform_5, window_bounds = array<i64: 128, 16>}, {pipeline_mode = #tpu.pipeline_mode<synchronous>, transform_indices = @transform_6, window_bounds = array<i64: 1, 16>}, {transform_indices = @transform_7, window_bounds = array<i64: 16, 16>}]} {
    %c0 = arith.constant 0 : index
    %c0_0 = arith.constant 0 : index
    %0 = vector.load %arg1[%c0, %c0_0] : memref<16x16xbf16, #tpu.memory_space<vmem>>, vector<16x16xbf16>
    %c0_1 = arith.constant 0 : index
    %c0_2 = arith.constant 0 : index
    %1 = vector.load %arg2[%c0_1, %c0_2] : memref<16x128xbf16, #tpu.memory_space<vmem>>, vector<16x128xbf16>
    %cst = arith.constant dense<0.000000e+00> : vector<16x128xf32>
    %2 = tpu.matmul %0, %1, %cst {dimension_numbers = #tpu.dot_dimension_numbers<[1], [0], [0], [1], [0, 0, 1, 1], [], []>} : vector<16x16xbf16>, vector<16x128xbf16>, vector<16x128xf32> -> vector<16x128xf32>
    %c0_3 = arith.constant 0 : index
    %c0_4 = arith.constant 0 : index
    %3 = vector.load %arg3[%c0_3, %c0_4] : memref<1x128xf32, #tpu.memory_space<vmem>>, vector<1x128xf32>
    %4 = vector.broadcast %3 : vector<1x128xf32> to vector<16x128xf32>
    %5 = arith.addf %2, %4 : vector<16x128xf32>
    %6 = math.tanh %5 : vector<16x128xf32>
    %7 = arith.truncf %6 : vector<16x128xf32> to vector<16x128xbf16>
    %c0_5 = arith.constant 0 : index
    %c0_6 = arith.constant 0 : index
    %8 = vector.load %arg4[%c0_5, %c0_6] : memref<128x128xbf16, #tpu.memory_space<vmem>>, vector<128x128xbf16>
    %cst_7 = arith.constant dense<0.000000e+00> : vector<16x128xf32>
    %9 = tpu.matmul %7, %8, %cst_7 {dimension_numbers = #tpu.dot_dimension_numbers<[1], [0], [0], [1], [0, 0, 1, 1], [], []>} : vector<16x128xbf16>, vector<128x128xbf16>, vector<16x128xf32> -> vector<16x128xf32>
    %c0_8 = arith.constant 0 : index
    %c0_9 = arith.constant 0 : index
    %10 = vector.load %arg5[%c0_8, %c0_9] : memref<1x128xf32, #tpu.memory_space<vmem>>, vector<1x128xf32>
    %11 = vector.broadcast %10 : vector<1x128xf32> to vector<16x128xf32>
    %12 = arith.addf %9, %11 : vector<16x128xf32>
    %13 = math.tanh %12 : vector<16x128xf32>
    %14 = arith.truncf %13 : vector<16x128xf32> to vector<16x128xbf16>
    %c0_10 = arith.constant 0 : index
    %c0_11 = arith.constant 0 : index
    %15 = vector.load %arg6[%c0_10, %c0_11] : memref<128x16xbf16, #tpu.memory_space<vmem>>, vector<128x16xbf16>
    %cst_12 = arith.constant dense<0.000000e+00> : vector<16x16xf32>
    %16 = tpu.matmul %14, %15, %cst_12 {dimension_numbers = #tpu.dot_dimension_numbers<[1], [0], [0], [1], [0, 0, 1, 1], [], []>} : vector<16x128xbf16>, vector<128x16xbf16>, vector<16x16xf32> -> vector<16x16xf32>
    %c0_13 = arith.constant 0 : index
    %c0_14 = arith.constant 0 : index
    %17 = vector.load %arg7[%c0_13, %c0_14] : memref<1x16xf32, #tpu.memory_space<vmem>>, vector<1x16xf32>
    %18 = vector.broadcast %17 : vector<1x16xf32> to vector<16x16xf32>
    %19 = arith.addf %16, %18 : vector<16x16xf32>
    %20 = vector.extract_strided_slice %19 {offsets = [0, 0], sizes = [16, 8], strides = [1, 1]} : vector<16x16xf32> to vector<16x8xf32>
    %21 = math.tanh %20 : vector<16x8xf32>
    %22 = arith.truncf %21 : vector<16x8xf32> to vector<16x8xbf16>
    %c0_15 = arith.constant 0 : index
    %c0_16 = arith.constant 0 : index
    %23 = vector.load %arg8[%c0_15, %c0_16] : memref<16x16xbf16, #tpu.memory_space<vmem>>, vector<16x8xbf16>
    tpu.vector_store %arg8[%c0_15, %c0_16], %22 {strides = array<i32>} : memref<16x16xbf16, #tpu.memory_space<vmem>>, vector<16x8xbf16>,
    %24 = vector.extract_strided_slice %19 {offsets = [0, 8], sizes = [16, 8], strides = [1, 1]} : vector<16x16xf32> to vector<16x8xf32>
    %25 = arith.truncf %24 : vector<16x8xf32> to vector<16x8xbf16>
    %c0_17 = arith.constant 0 : index
    %c8 = arith.constant 8 : index
    %26 = vector.load %arg8[%c0_17, %c8] : memref<16x16xbf16, #tpu.memory_space<vmem>>, vector<16x8xbf16>
    tpu.vector_store %arg8[%c0_17, %c8], %25 {strides = array<i32>} : memref<16x16xbf16, #tpu.memory_space<vmem>>, vector<16x8xbf16>,
    return
  }
  func.func @transform_0(%arg0: i32) -> (i32, i32) {
    %c0_i32 = arith.constant 0 : i32
    %c0_i32_0 = arith.constant 0 : i32
    return %arg0, %c0_i32 : i32, i32
  }
  func.func @transform_1(%arg0: i32) -> (i32, i32) {
    %c0_i32 = arith.constant 0 : i32
    %c0_i32_0 = arith.constant 0 : i32
    %c0_i32_1 = arith.constant 0 : i32
    return %c0_i32, %c0_i32_0 : i32, i32
  }
  func.func @transform_2(%arg0: i32) -> (i32, i32) {
    %c0_i32 = arith.constant 0 : i32
    %c0_i32_0 = arith.constant 0 : i32
    %c0_i32_1 = arith.constant 0 : i32
    return %c0_i32, %c0_i32_0 : i32, i32
  }
  func.func @transform_3(%arg0: i32) -> (i32, i32) {
    %c0_i32 = arith.constant 0 : i32
    %c0_i32_0 = arith.constant 0 : i32
    %c0_i32_1 = arith.constant 0 : i32
    return %c0_i32, %c0_i32_0 : i32, i32
  }
  func.func @transform_4(%arg0: i32) -> (i32, i32) {
    %c0_i32 = arith.constant 0 : i32
    %c0_i32_0 = arith.constant 0 : i32
    %c0_i32_1 = arith.constant 0 : i32
    return %c0_i32, %c0_i32_0 : i32, i32
  }
  func.func @transform_5(%arg0: i32) -> (i32, i32) {
    %c0_i32 = arith.constant 0 : i32
    %c0_i32_0 = arith.constant 0 : i32
    %c0_i32_1 = arith.constant 0 : i32
    return %c0_i32, %c0_i32_0 : i32, i32
  }
  func.func @transform_6(%arg0: i32) -> (i32, i32) {
    %c0_i32 = arith.constant 0 : i32
    %c0_i32_0 = arith.constant 0 : i32
    %c0_i32_1 = arith.constant 0 : i32
    return %c0_i32, %c0_i32_0 : i32, i32
  }
  func.func @transform_7(%arg0: i32) -> (i32, i32) {
    %c0_i32 = arith.constant 0 : i32
    %c0_i32_0 = arith.constant 0 : i32
    return %arg0, %c0_i32 : i32, i32
  }
}

</mosaic_0001>

<llo_original>
// kernel: mujoco_ff_forward.1
$region0: #{mujoco_ff_forward.1}
  #allocation0 [shape = 'u32[]', space=smem, size = 0x4, offset = 0x4, fixed_abs, tag = 'smem constant byte address 0x4 - core index']
  #allocation1 [shape = 'u32[144,128]{1,0:T(1,128)}', space=vmem, size = 0x12000, scoped, tag = 'internal scratch']
  %s0 = inlined_call_operand.vmem [shape: bf16[16,16], index: 0, kind: input, shape index: {}]
  %s1 = inlined_call_operand.vmem [shape: bf16[16,128], index: 1, kind: input, shape index: {}]
  %s2 = inlined_call_operand.vmem [shape: f32[1,128], index: 2, kind: input, shape index: {}]
  %s3 = inlined_call_operand.hbm [shape: bf16[128,128], index: 3, kind: input, shape index: {}]
  %s4 = inlined_call_operand.vmem [shape: f32[1,128], index: 4, kind: input, shape index: {}]
  %s5 = inlined_call_operand.hbm [shape: bf16[128,16], index: 5, kind: input, shape index: {}]
  %s6 = inlined_call_operand.vmem [shape: f32[1,16], index: 6, kind: input, shape index: {}]
  %s7 = inlined_call_operand.vmem [shape: bf16[16,16], index: 7, kind: output, shape index: {}]
  %s8 = sld [smem:[#allocation0]]
  $region46: #{mujoco_ff_forward.1} parent=0
    _
  %s10 = ssub.s32 1, %s8
  %s11 = scalar_select 0, %s10, %s8
  $region1: #{mujoco_ff_forward.1} parent=0
    #allocation2 [shape = 'u8[32768]{0}', space=vmem, size = 0x8000, scoped, tag = 'input window, operand 3, single buffered']
    #allocation3 [shape = 's32[1]{0}', space=sflag, size = 0x4, scoped, tag = 'scoped memory for mujoco_ff_forward.1']
    #allocation4 [shape = 'u8[32768]{0}', space=vmem, size = 0x8000, scoped, tag = 'input window, operand 5, single buffered']
    #allocation5 [shape = 's32[1]{0}', space=sflag, size = 0x4, scoped, tag = 'scoped memory for mujoco_ff_forward.1']
    %12 = vsyncpa [#allocation3], 0
    %13 = vsyncpa [#allocation5], 0
    // Predicated region
    $region2: #{mujoco_ff_forward.1} parent=1 // pred_check
      _
    $region3: #{mujoco_ff_forward.1} parent=1 // pred_check_branch
      %15 = sbr.rel (0) target = $region5
    $region4: #{mujoco_ff_forward.1} parent=1 // pred_region
      _
    $region5: #{mujoco_ff_forward.1} parent=1 // pred_fallthru
      _
    // Predicated region
    $region6: #{mujoco_ff_forward.1} parent=1 // pred_check
      _
    $region7: #{mujoco_ff_forward.1} parent=1 // pred_check_branch
      %17 = sbr.rel (0) target = $region9
    $region8: #{mujoco_ff_forward.1} parent=1 // pred_region
      _
    $region9: #{mujoco_ff_forward.1} parent=1 // pred_fallthru
      _
    // Predicated region
    $region10: #{mujoco_ff_forward.1} parent=1 // pred_check
      _
    $region11: #{mujoco_ff_forward.1} parent=1 // pred_check_branch
      %19 = sbr.rel (0) target = $region13
    $region12: #{mujoco_ff_forward.1} parent=1 // pred_region
      _
    $region13: #{mujoco_ff_forward.1} parent=1 // pred_fallthru
      _
    // Predicated region
    $region14: #{mujoco_ff_forward.1} parent=1 // pred_check
      _
    $region15: #{mujoco_ff_forward.1} parent=1 // pred_check_branch
      %21 = sbr.rel (0) target = $region17
    $region16: #{mujoco_ff_forward.1} parent=1 // pred_region
      %s23 = ssub.s32 1024, 1024
      %24 = vsyncadd [#allocation3], %s23
      %s25 = sshll.u32 [#allocation2], 4
      %s26 = int_to_ptr.vmem [resolvable:$true] %s25
      %31 = dma.hbm_to_vmem [thread:$0]  %s3, 1024, %s26, [#allocation3], 64, 64, 4
    $region17: #{mujoco_ff_forward.1} parent=1 // pred_fallthru
      _
    // Predicated region
    $region18: #{mujoco_ff_forward.1} parent=1 // pred_check
      _
    $region19: #{mujoco_ff_forward.1} parent=1 // pred_check_branch
      %33 = sbr.rel (0) target = $region21
    $region20: #{mujoco_ff_forward.1} parent=1 // pred_region
      _
    $region21: #{mujoco_ff_forward.1} parent=1 // pred_fallthru
      _
    // Predicated region
    $region22: #{mujoco_ff_forward.1} parent=1 // pred_check
      _
    $region23: #{mujoco_ff_forward.1} parent=1 // pred_check_branch
      %35 = sbr.rel (0) target = $region25
    $region24: #{mujoco_ff_forward.1} parent=1 // pred_region
      %s37 = ssub.s32 1024, 1024
      %38 = vsyncadd [#allocation5], %s37
      %s39 = sshll.u32 [#allocation4], 4
      %s40 = int_to_ptr.vmem [resolvable:$true] %s39
      %45 = dma.hbm_to_vmem [thread:$0]  %s5, 1024, %s40, [#allocation5], 64, 64, 4
    $region25: #{mujoco_ff_forward.1} parent=1 // pred_fallthru
      _
    // Predicated region
    $region26: #{mujoco_ff_forward.1} parent=1 // pred_check
      _
    $region27: #{mujoco_ff_forward.1} parent=1 // pred_check_branch
      %47 = sbr.rel (0) target = $region29
    $region28: #{mujoco_ff_forward.1} parent=1 // pred_region
      _
    $region29: #{mujoco_ff_forward.1} parent=1 // pred_fallthru
      _
    // Predicated region
    $region30: #{mujoco_ff_forward.1} parent=1 // pred_check
      _
    $region31: #{mujoco_ff_forward.1} parent=1 // pred_check_branch
      %49 = sbr.rel (0) target = $region33
    $region32: #{mujoco_ff_forward.1} parent=1 // pred_region
      %50 = dma.done [#allocation3], 1024
    $region33: #{mujoco_ff_forward.1} parent=1 // pred_fallthru
      _
    // Predicated region
    $region34: #{mujoco_ff_forward.1} parent=1 // pred_check
      _
    $region35: #{mujoco_ff_forward.1} parent=1 // pred_check_branch
      %52 = sbr.rel (0) target = $region37
    $region36: #{mujoco_ff_forward.1} parent=1 // pred_region
      %53 = dma.done [#allocation5], 1024
    $region37: #{mujoco_ff_forward.1} parent=1 // pred_fallthru
      _
    %v55 = vld [vmem:[%s0] sm:$0xf]
    %v56 = vld [vmem:[%s0 + $0x4] sm:$0xf]
    %v57 = vld [vmem:[%s1] sm:$0xf]
    %v58 = vld [vmem:[%s1 + $0x4] sm:$0xf]
    %v59 = vld [vmem:[%s2] sm:$0x1]
    %v61 = vlaneseq
    %v62 = vshrl.u32 %v61, 7
    %v63 = vsub.s32 0, %v62
    %v64 = vrot.slane %v59, %v63
    %v68 = vunpack.c.l.b16 %v55
    %v69 = vunpack.c.l.b16 %v56
    %v70 = vpack.c.b16 %v69, %v68
    %v73 = vunpack.c.l.b16 %v57
    %v74 = vunpack.c.l.b16 %v58
    %v75 = vpack.c.b16 %v74, %v73
    %vm77 = vcmask 130048
    %v79 = vsel %vm77, %v70, 0
    %81 = vmatprep.subr.bf16.mxu0 0
    %82 = vmatpush1.bf16.msra.mxu0 0
    %83 = vmatprep.subr.bf16.mxu0 0
    %84 = vmatpush1.bf16.msra.mxu0 0
    %85 = vmatprep.subr.bf16.mxu0 0
    %86 = vmatpush1.bf16.msra.mxu0 0
    %87 = vmatprep.subr.bf16.mxu0 0
    %88 = vmatpush1.bf16.msra.mxu0 0
    %89 = vmatprep.subr.bf16.mxu0 0
    %90 = vmatpush1.bf16.msra.mxu0 0
    %91 = vmatprep.subr.bf16.mxu0 0
    %92 = vmatpush1.bf16.msra.mxu0 0
    %93 = vmatprep.subr.bf16.mxu0 0
    %94 = vmatpush1.bf16.msra.mxu0 0
    %95 = vmatprep.subr.bf16.mxu0 0
    %96 = vmatpush1.bf16.msra.mxu0 %v75
    %97 = vmatprep.subr.bf16.mxu0 0
    %98 = vmatpush2.bf16.msra.mxu0 0
    %99 = vmatprep.subr.bf16.mxu0 0
    %100 = vmatpush2.bf16.msra.mxu0 0
    %101 = vmatprep.subr.bf16.mxu0 0
    %102 = vmatpush2.bf16.msra.mxu0 0
    %103 = vmatprep.subr.bf16.mxu0 0
    %104 = vmatpush2.bf16.msra.mxu0 0
    %105 = vmatprep.subr.bf16.mxu0 0
    %106 = vmatpush2.bf16.msra.mxu0 0
    %107 = vmatprep.subr.bf16.mxu0 0
    %108 = vmatpush2.bf16.msra.mxu0 0
    %109 = vmatprep.subr.bf16.mxu0 0
    %110 = vmatpush2.bf16.msra.mxu0 0
    %111 = vmatprep.subr.bf16.mxu0 0
    %112 = vmatpush2.bf16.msra.mxu0 0
    %113 = vmatprep.mubr.bf16.mxu0 0
    %114 = vmatmul.mubr.bf16.gmra.mxu0 %v79
    %v115 = vpop.f32.mrf.mxu0
    %v116 = vadd.f32 %v64, %v115
    %v117 = vpop.f32.mrf.mxu0
    %v118 = vpop.f32.mrf.mxu0
    %v119 = vadd.f32 %v64, %v118
    %v120 = vpop.f32.mrf.mxu0
    %121 = vdwg.mxu0
    %v122 = vtanh.pop %v116
    %v123 = vtanh.pop %v119
    %v124 = vpack.c.bf16 %v123, %v122
    %v125 = vld [vmem:[#allocation2] sm:$0xf]
    %v126 = vld [vmem:[#allocation2 + $0x4] sm:$0xf]
    %v127 = vld [vmem:[#allocation2 + $0x8] sm:$0xf]
    %v128 = vld [vmem:[#allocation2 + $0xc] sm:$0xf]
    %v129 = vld [vmem:[#allocation2 + $0x10] sm:$0xf]
    %v130 = vld [vmem:[#allocation2 + $0x14] sm:$0xf]
    %v131 = vld [vmem:[#allocation2 + $0x18] sm:$0xf]
    %v132 = vld [vmem:[#allocation2 + $0x1c] sm:$0xf]
    %v133 = vld [vmem:[#allocation2 + $0x20] sm:$0xf]
    %v134 = vld [vmem:[#allocation2 + $0x24] sm:$0xf]
    %v135 = vld [vmem:[#allocation2 + $0x28] sm:$0xf]
    %v136 = vld [vmem:[#allocation2 + $0x2c] sm:$0xf]
    %v137 = vld [vmem:[#allocation2 + $0x30] sm:$0xf]
    %v138 = vld [vmem:[#allocation2 + $0x34] sm:$0xf]
    %v139 = vld [vmem:[#allocation2 + $0x38] sm:$0xf]
    %v140 = vld [vmem:[#allocation2 + $0x3c] sm:$0xf]
    %v141 = vld [vmem:[%s4] sm:$0x1]
    %v143 = vlaneseq
    %v144 = vshrl.u32 %v143, 7
    %v145 = vsub.s32 0, %v144
    %v146 = vrot.slane %v141, %v145
    %v164 = vunpack.c.l.b16 %v125
    %v165 = vunpack.c.l.b16 %v126
    %v166 = vunpack.c.l.b16 %v127
    %v167 = vunpack.c.l.b16 %v128
    %v168 = vunpack.c.l.b16 %v129
    %v169 = vunpack.c.l.b16 %v130
    %v170 = vunpack.c.l.b16 %v131
    %v171 = vunpack.c.l.b16 %v132
    %v172 = vunpack.c.l.b16 %v133
    %v173 = vunpack.c.l.b16 %v134
    %v174 = vunpack.c.l.b16 %v135
    %v175 = vunpack.c.l.b16 %v136
    %v176 = vunpack.c.l.b16 %v137
    %v177 = vunpack.c.l.b16 %v138
    %v178 = vunpack.c.l.b16 %v139
    %v179 = vunpack.c.l.b16 %v140
    %v180 = vpack.c.b16 %v165, %v164
    %v181 = vpack.c.b16 %v167, %v166
    %v182 = vpack.c.b16 %v169, %v168
    %v183 = vpack.c.b16 %v171, %v170
    %v184 = vpack.c.b16 %v173, %v172
    %v185 = vpack.c.b16 %v175, %v174
    %v186 = vpack.c.b16 %v177, %v176
    %v187 = vpack.c.b16 %v179, %v178
    %196 = vmatprep.subr.bf16.mxu0 0
    %197 = vmatpush1.bf16.msra.mxu0 %v187
    %198 = vmatprep.subr.bf16.mxu0 0
    %199 = vmatpush1.bf16.msra.mxu0 %v186
    %200 = vmatprep.subr.bf16.mxu0 0
    %201 = vmatpush1.bf16.msra.mxu0 %v185
    %202 = vmatprep.subr.bf16.mxu0 0
    %203 = vmatpush1.bf16.msra.mxu0 %v184
    %204 = vmatprep.subr.bf16.mxu0 0
    %205 = vmatpush1.bf16.msra.mxu0 %v183
    %206 = vmatprep.subr.bf16.mxu0 0
    %207 = vmatpush1.bf16.msra.mxu0 %v182
    %208 = vmatprep.subr.bf16.mxu0 0
    %209 = vmatpush1.bf16.msra.mxu0 %v181
    %210 = vmatprep.subr.bf16.mxu0 0
    %211 = vmatpush1.bf16.msra.mxu0 %v180
    %212 = vmatprep.subr.bf16.mxu0 0
    %213 = vmatpush2.bf16.msra.mxu0 0
    %214 = vmatprep.subr.bf16.mxu0 0
    %215 = vmatpush2.bf16.msra.mxu0 0
    %216 = vmatprep.subr.bf16.mxu0 0
    %217 = vmatpush2.bf16.msra.mxu0 0
    %218 = vmatprep.subr.bf16.mxu0 0
    %219 = vmatpush2.bf16.msra.mxu0 0
    %220 = vmatprep.subr.bf16.mxu0 0
    %221 = vmatpush2.bf16.msra.mxu0 0
    %222 = vmatprep.subr.bf16.mxu0 0
    %223 = vmatpush2.bf16.msra.mxu0 0
    %224 = vmatprep.subr.bf16.mxu0 0
    %225 = vmatpush2.bf16.msra.mxu0 0
    %226 = vmatprep.subr.bf16.mxu0 0
    %227 = vmatpush2.bf16.msra.mxu0 0
    %228 = vmatprep.mubr.bf16.mxu0 0
    %229 = vmatmul.mubr.bf16.gmra.mxu0 %v124
    %v230 = vpop.f32.mrf.mxu0
    %v231 = vadd.f32 %v146, %v230
    %v232 = vpop.f32.mrf.mxu0
    %v233 = vpop.f32.mrf.mxu0
    %v234 = vadd.f32 %v146, %v233
    %v235 = vpop.f32.mrf.mxu0
    %236 = vdwg.mxu0
    %v237 = vtanh.pop %v231
    %v238 = vtanh.pop %v234
    %v239 = vpack.c.bf16 %v238, %v237
    %v240 = vld [vmem:[#allocation4] sm:$0xf]
    %v241 = vld [vmem:[#allocation4 + $0x4] sm:$0xf]
    %v242 = vld [vmem:[#allocation4 + $0x8] sm:$0xf]
    %v243 = vld [vmem:[#allocation4 + $0xc] sm:$0xf]
    %v244 = vld [vmem:[#allocation4 + $0x10] sm:$0xf]
    %v245 = vld [vmem:[#allocation4 + $0x14] sm:$0xf]
    %v246 = vld [vmem:[#allocation4 + $0x18] sm:$0xf]
    %v247 = vld [vmem:[#allocation4 + $0x1c] sm:$0xf]
    %v248 = vld [vmem:[#allocation4 + $0x20] sm:$0xf]
    %v249 = vld [vmem:[#allocation4 + $0x24] sm:$0xf]
    %v250 = vld [vmem:[#allocation4 + $0x28] sm:$0xf]
    %v251 = vld [vmem:[#allocation4 + $0x2c] sm:$0xf]
    %v252 = vld [vmem:[#allocation4 + $0x30] sm:$0xf]
    %v253 = vld [vmem:[#allocation4 + $0x34] sm:$0xf]
    %v254 = vld [vmem:[#allocation4 + $0x38] sm:$0xf]
    %v255 = vld [vmem:[#allocation4 + $0x3c] sm:$0xf]
    %v256 = vld [vmem:[%s6] sm:$0x1]
    %v258 = vlaneseq
    %v259 = vshrl.u32 %v258, 7
    %v260 = vsub.s32 0, %v259
    %v261 = vrot.slane %v256, %v260
    %v279 = vunpack.c.l.b16 %v240
    %v280 = vunpack.c.l.b16 %v241
    %v281 = vunpack.c.l.b16 %v242
    %v282 = vunpack.c.l.b16 %v243
    %v283 = vunpack.c.l.b16 %v244
    %v284 = vunpack.c.l.b16 %v245
    %v285 = vunpack.c.l.b16 %v246
    %v286 = vunpack.c.l.b16 %v247
    %v287 = vunpack.c.l.b16 %v248
    %v288 = vunpack.c.l.b16 %v249
    %v289 = vunpack.c.l.b16 %v250
    %v290 = vunpack.c.l.b16 %v251
    %v291 = vunpack.c.l.b16 %v252
    %v292 = vunpack.c.l.b16 %v253
    %v293 = vunpack.c.l.b16 %v254
    %v294 = vunpack.c.l.b16 %v255
    %v295 = vpack.c.b16 %v280, %v279
    %v296 = vpack.c.b16 %v282, %v281
    %v297 = vpack.c.b16 %v284, %v283
    %v298 = vpack.c.b16 %v286, %v285
    %v299 = vpack.c.b16 %v288, %v287
    %v300 = vpack.c.b16 %v290, %v289
    %v301 = vpack.c.b16 %v292, %v291
    %v302 = vpack.c.b16 %v294, %v293
    %311 = vmatprep.subr.bf16.mxu0 0
    %312 = vmatpush1.bf16.msra.mxu0 %v302
    %313 = vmatprep.subr.bf16.mxu0 0
    %314 = vmatpush1.bf16.msra.mxu0 %v301
    %315 = vmatprep.subr.bf16.mxu0 0
    %316 = vmatpush1.bf16.msra.mxu0 %v300
    %317 = vmatprep.subr.bf16.mxu0 0
    %318 = vmatpush1.bf16.msra.mxu0 %v299
    %319 = vmatprep.subr.bf16.mxu0 0
    %320 = vmatpush1.bf16.msra.mxu0 %v298
    %321 = vmatprep.subr.bf16.mxu0 0
    %322 = vmatpush1.bf16.msra.mxu0 %v297
    %323 = vmatprep.subr.bf16.mxu0 0
    %324 = vmatpush1.bf16.msra.mxu0 %v296
    %325 = vmatprep.subr.bf16.mxu0 0
    %326 = vmatpush1.bf16.msra.mxu0 %v295
    %327 = vmatprep.subr.bf16.mxu0 0
    %328 = vmatpush2.bf16.msra.mxu0 0
    %329 = vmatprep.subr.bf16.mxu0 0
    %330 = vmatpush2.bf16.msra.mxu0 0
    %331 = vmatprep.subr.bf16.mxu0 0
    %332 = vmatpush2.bf16.msra.mxu0 0
    %333 = vmatprep.subr.bf16.mxu0 0
    %334 = vmatpush2.bf16.msra.mxu0 0
    %335 = vmatprep.subr.bf16.mxu0 0
    %336 = vmatpush2.bf16.msra.mxu0 0
    %337 = vmatprep.subr.bf16.mxu0 0
    %338 = vmatpush2.bf16.msra.mxu0 0
    %339 = vmatprep.subr.bf16.mxu0 0
    %340 = vmatpush2.bf16.msra.mxu0 0
    %341 = vmatprep.subr.bf16.mxu0 0
    %342 = vmatpush2.bf16.msra.mxu0 0
    %343 = vmatprep.mubr.bf16.mxu0 0
    %344 = vmatmul.mubr.bf16.gmra.mxu0 %v239
    %v345 = vpop.f32.mrf.mxu0
    %v346 = vadd.f32 %v261, %v345
    %v347 = vpop.f32.mrf.mxu0
    %v348 = vpop.f32.mrf.mxu0
    %v349 = vadd.f32 %v261, %v348
    %v350 = vpop.f32.mrf.mxu0
    %351 = vdwg.mxu0
    %v352 = vtanh.pop %v346
    %v353 = vtanh.pop %v349
    %v354 = vpack.c.bf16 %v353, %v352
    %v356 = vunpack.c.l.b16 %v354
    %v357 = vunpack.c.h.b16 %v354
    %v358 = vpack.c.b16 %v356, %v356
    %v359 = vpack.c.b16 %v357, %v357
    %vm362 = vcmask 60416
    %363 = vst.msk [vmem:[%s7] sm:$0xf] %vm362, %v358
    %364 = vst.msk [vmem:[%s7 + $0x4] sm:$0xf] %vm362, %v359
    %v365 = vpack.c.bf16 %v349, %v346
    %v367 = vunpack.c.l.b16 %v365
    %v368 = vunpack.c.h.b16 %v365
    %v369 = vpack.c.b16 %v367, %v367
    %v370 = vpack.c.b16 %v368, %v368
    %vm373 = vcmask 126016
    %374 = vst.msk [vmem:[%s7] sm:$0xf] %vm373, %v369
    %375 = vst.msk [vmem:[%s7 + $0x4] sm:$0xf] %vm373, %v370
    // Predicated region
    $region38: #{mujoco_ff_forward.1} parent=1 // pred_check
      _
    $region39: #{mujoco_ff_forward.1} parent=1 // pred_check_branch
      %377 = sbr.rel (0) target = $region41
    $region40: #{mujoco_ff_forward.1} parent=1 // pred_region
      _
    $region41: #{mujoco_ff_forward.1} parent=1 // pred_fallthru
      _
    // Predicated region
    $region42: #{mujoco_ff_forward.1} parent=1 // pred_check
      _
    $region43: #{mujoco_ff_forward.1} parent=1 // pred_check_branch
      %379 = sbr.rel (0) target = $region45
    $region44: #{mujoco_ff_forward.1} parent=1 // pred_region
      _
    $region45: #{mujoco_ff_forward.1} parent=1 // pred_fallthru
      _
    %380 = vsyncpa [#allocation3], 1
    %381 = vsyncpa [#allocation5], 1

</llo_original>
